<compile_context>
chip_gen: v7x
topology: tpu7x:2x2x1
jax: 0.10.0
libtpu: 0.0.40
codegen_flags: <defaults>
</compile_context>

<pallas_src>
import functools

import jax
import jax.numpy as jnp
import numpy as np
from jax.experimental import pallas as pl
from jax.experimental.pallas import tpu as pltpu


def _round_up(n, m):
    return -(-n // m) * m


# ----------------------------------------------------------------------------
# pltpu.roll direction probe (cached: one tiny device round trip per process).
# We rely on pltpu.roll(x, s, axis) == np.roll(x, sign*s, axis) for a fixed
# sign; detect it once on-device so the kernel is robust across jax versions.
# ----------------------------------------------------------------------------
_ROLL_SIGN = None


def detect_roll_sign():
    global _ROLL_SIGN
    if _ROLL_SIGN is not None:
        return _ROLL_SIGN

    def _kernel(x_ref, o_ref):
        o_ref[...] = pltpu.roll(x_ref[...], 1, 1)

    x = jnp.arange(8 * 128, dtype=jnp.float32).reshape(8, 128)
    y = pl.pallas_call(
        _kernel, out_shape=jax.ShapeDtypeStruct((8, 128), jnp.float32))(x)
    y = np.asarray(jax.block_until_ready(y))
    xn = np.asarray(x)
    if np.array_equal(y, np.roll(xn, 1, axis=1)):
        _ROLL_SIGN = 1
    elif np.array_equal(y, np.roll(xn, -1, axis=1)):
        _ROLL_SIGN = -1
    else:
        raise RuntimeError("could not determine pltpu.roll direction")
    return _ROLL_SIGN


# ----------------------------------------------------------------------------
# Pallas kernel: ALL coupling flows, one batch element per grid step
# ----------------------------------------------------------------------------
def _coupling_block_kernel(x0_ref, x1_ref, mask_ref,
                           pre_w_ref, pre_b_ref,
                           in_w_ref, in_b_ref,
                           rs_w_ref, rs_b_ref,
                           post_w_ref, post_b_ref,
                           out_ref, taps_ref, *,
                           n_flows, half, hidden, n_layers, kernel_size,
                           dilation_rate, roll_sign):
    f32 = jnp.float32
    bf16 = jnp.bfloat16
    u = x0_ref[0].astype(f32)            # stored x0 stream   (half, T)
    v = x1_ref[0].astype(f32)            # stored x1 stream   (half, T)
    mask = mask_ref[0].astype(f32)       # (1, T); MUST be zero over the T padding
    T = u.shape[-1]

    # Hoisted once: JAX does not CSE broadcasts inside the unrolled loops.
    mask_h = jnp.broadcast_to(mask, (hidden, T))                 # (hidden, T)
    t_idx = jax.lax.broadcasted_iota(jnp.int32, (1, T), 1)       # lane index
    zero_b = jnp.zeros((), bf16)

    for f in range(n_flows):
        # pre 1x1 conv (K = half).  bf16 operands, f32 accumulation.
        # TODO(synk): fold the pre conv into the layer-0 tap weights
        # (K: k*hidden -> k*half) once the shifted-mask bias term is handled
        # in the offline weight prep.
        h = (jnp.dot(pre_w_ref[f], u.astype(bf16), preferred_element_type=f32)
             + pre_b_ref[f]) * mask_h                            # (hidden, T) f32

        output = jnp.zeros((hidden, T), f32)
        for i in range(n_layers):
            d = dilation_rate ** i
            pad = (kernel_size * d - d) // 2
            # Dilated conv: tap j needs h shifted in time by s = pad - j*d with
            # zero padding at the edges.  Each tap = one XLU roll of the bf16
            # hidden state + an iota edge mask, staged into a VMEM scratch so
            # all k taps feed ONE MXU matmul with K = kernel_size*hidden
            # (no concat copy, no transient with all k shifted copies live).
            h_b = h.astype(bf16)
            for j in range(kernel_size):
                s = pad - j * d
                row = j * hidden
                if s == 0:
                    taps_ref[row:row + hidden, :] = h_b
                else:
                    rolled = pltpu.roll(h_b, (roll_sign * s) % T, 1)
                    valid = (t_idx >= s) if s > 0 else (t_idx < T + s)
                    taps_ref[row:row + hidden, :] = jnp.where(valid, rolled, zero_b)
            # TODO(synk): on v7x (MRB) k per-tap matmuls accumulating in place
            # would remove this staging buffer; keep the stacked-K form on
            # v5e/v6e where splitting adds result-FIFO pops + VPU adds.
            x_in = (jnp.dot(in_w_ref[f, i], taps_ref[...],
                            preferred_element_type=f32)
                    + in_b_ref[f, i])                            # (2*hidden, T) f32

            # fused_add_tanh_sigmoid_multiply (gin_channels == 0 -> no g term)
            acts = jnp.tanh(x_in[:hidden]) * jax.nn.sigmoid(x_in[hidden:])
            acts_b = acts.astype(bf16)

            if i < n_layers - 1:
                rs = (jnp.dot(rs_w_ref[f, i], acts_b, preferred_element_type=f32)
                      + rs_b_ref[f, i])                          # (2*hidden, T)
                h = (h + rs[:hidden]) * mask_h
                output = output + rs[hidden:]
            else:
                # last WN layer only has `hidden` output channels: slice at the
                # Ref level so only the live half of the weight is loaded.
                rs = (jnp.dot(rs_w_ref[f, i, :hidden], acts_b,
                              preferred_element_type=f32)
                      + rs_b_ref[f, i, :hidden])
                output = output + rs

        h_out = (output * mask_h).astype(bf16)

        # post 1x1 conv; mean_only=True -> stats == m, logs == 0, exp(logs) == 1
        m = (jnp.dot(post_w_ref[f], h_out, preferred_element_type=f32)
             + post_b_ref[f]) * mask
        v_new = m + v * mask

        # Flip (channel reversal of cat([x0, x1_new])) is folded into static
        # weight permutations in the wrapper; in storage space it is a swap.
        u, v = v_new, u

    out_ref[0] = jnp.concatenate([u, v], axis=0).astype(out_ref.dtype)


# ----------------------------------------------------------------------------
# Weight preparation (flip folding, bf16 cast, tap flattening, flow stacking)
# ----------------------------------------------------------------------------
def _prep_flow_weights(p, *, flip_x0, flip_out, hidden, n_layers, kernel_size):
    bf16 = jnp.bfloat16
    pre_w = p["pre_w"][:, ::-1] if flip_x0 else p["pre_w"]
    post_w = p["post_w"][::-1, :] if flip_out else p["post_w"]
    post_b = p["post_b"][::-1, :] if flip_out else p["post_b"]
    # (n_layers, k, 2H, H) -> (n_layers, 2H, k*H): tap-major along contraction,
    # matching the row layout of the tap staging scratch in the kernel.
    in_w = jnp.transpose(p["in_w"], (0, 2, 1, 3)).reshape(
        n_layers, 2 * hidden, kernel_size * hidden)
    return dict(pre_w=pre_w.astype(bf16), pre_b=p["pre_b"],
                in_w=in_w.astype(bf16), in_b=p["in_b"],
                rs_w=p["rs_w"].astype(bf16), rs_b=p["rs_b"],
                post_w=post_w.astype(bf16), post_b=post_b)


_WEIGHT_NAMES = ("pre_w", "pre_b", "in_w", "in_b",
                 "rs_w", "rs_b", "post_w", "post_b")


def _prep_block_weights(flow_params, *, hidden, n_layers, kernel_size):
    """Fold per-flow Flips into static permutations, cast to bf16, and stack
    all flows on a leading flow axis.  Returns (weights, pu, pv) where pu/pv
    are the final channel-reversal parities of the stored x0/x1 streams."""
    prepped = []
    pu = pv = 0
    for p in flow_params:
        prepped.append(_prep_flow_weights(
            p, flip_x0=bool(pu), flip_out=bool(pv),
            hidden=hidden, n_layers=n_layers, kernel_size=kernel_size))
        # after a flow + Flip:  x0' = rev(x1_new),  x1' = rev(x0)
        pu, pv = pv ^ 1, pu ^ 1
    stacked = tuple(jnp.stack([q[name] for q in prepped], axis=0)
                    for name in _WEIGHT_NAMES)
    return stacked, pu, pv


def _vmem_limit_bytes(weights, *, half, channels, hidden, kernel_size, t_pad):
    """Footprint-derived scoped-VMEM limit (weights are Buffered(1))."""
    w_bytes = sum(int(np.prod(w.shape)) * w.dtype.itemsize for w in weights)
    io_bytes = 2 * (2 * half + 1) * t_pad * 4       # x0 + x1 + mask, double-buffered
    out_bytes = 2 * channels * t_pad * 4            # output, double-buffered
    taps = kernel_size * hidden * t_pad * 2         # bf16 tap staging scratch
    work = 12 * hidden * t_pad * 4                  # live f32 intermediates / layer
    total = w_bytes + io_bytes + out_bytes + taps + work
    return int(min(max(2 * total, 32 << 20), 64 << 20))


# ----------------------------------------------------------------------------
# Wrapper: ResidualCouplingBlock.forward(x, x_mask, g=None, reverse=False)
# ----------------------------------------------------------------------------
def residual_coupling_block_forward(x, x_mask, flow_params, *, hidden, n_layers,
                                    kernel_size, dilation_rate, roll_sign):
    B, C, T = x.shape
    half = C // 2
    n_flows = len(flow_params)
    T_pad = _round_up(T, 128)
    d_max = dilation_rate ** (n_layers - 1)
    assert (kernel_size * d_max - d_max) // 2 < T_pad, \
        "receptive-field shift exceeds the padded sequence length"

    x0, x1, mask = x[:, :half], x[:, half:], x_mask
    if T_pad != T:
        padw = ((0, 0), (0, 0), (0, T_pad - T))
        # NOTE: zero padding + zero mask over the pad region is what makes the
        # roll-based dilated-conv edge handling exact; do not remove either.
        x0, x1, mask = jnp.pad(x0, padw), jnp.pad(x1, padw), jnp.pad(x_mask, padw)

    weights, pu, pv = _prep_block_weights(
        flow_params, hidden=hidden, n_layers=n_layers, kernel_size=kernel_size)

    kern = functools.partial(
        _coupling_block_kernel, n_flows=n_flows, half=half, hidden=hidden,
        n_layers=n_layers, kernel_size=kernel_size,
        dilation_rate=dilation_rate, roll_sign=roll_sign)

    def _const_spec(a):
        nd = a.ndim
        # Constant index map over the B grid -> single-buffer the weights
        # (the 2nd pipeline buffer would be pure VMEM waste).
        return pl.BlockSpec(a.shape, lambda b, nd=nd: (0,) * nd,
                            pipeline_mode=pl.Buffered(1))

    # TODO(synk): for long sequences (T >= ~2K) add a parallel T-tile grid axis
    # with a receptive-field halo so both v7x TensorCores get work and the
    # per-step intermediates stay inside the 64 MiB VMEM budget.
    out = pl.pallas_call(
        kern,
        out_shape=jax.ShapeDtypeStruct((B, C, T_pad), x.dtype),
        grid=(B,),
        in_specs=[
            pl.BlockSpec((1, half, T_pad), lambda b: (b, 0, 0)),   # x0
            pl.BlockSpec((1, half, T_pad), lambda b: (b, 0, 0)),   # x1
            pl.BlockSpec((1, 1, T_pad), lambda b: (b, 0, 0)),      # x_mask
        ] + [_const_spec(w) for w in weights],
        out_specs=pl.BlockSpec((1, C, T_pad), lambda b: (b, 0, 0)),
        scratch_shapes=[pltpu.VMEM((kernel_size * hidden, T_pad), jnp.bfloat16)],
        compiler_params=pltpu.CompilerParams(
            dimension_semantics=("parallel",),
            vmem_limit_bytes=_vmem_limit_bytes(
                weights, half=half, channels=C, hidden=hidden,
                kernel_size=kernel_size, t_pad=T_pad)),
    )(x0, x1, mask, *weights)

    if pu or pv:   # odd n_flows: stored streams are channel-reversed
        u, v = out[:, :half], out[:, half:]
        if pu:
            u = u[:, ::-1]
        if pv:
            v = v[:, ::-1]
        out = jnp.concatenate([u, v], axis=1)
    return out[:, :, :T]


# ----------------------------------------------------------------------------
# Deterministic parameter init (shapes follow the PyTorch module __init__)
# ----------------------------------------------------------------------------
def init_flow_params(key, half, hidden, kernel_size, n_layers, scale=0.1):
    ks = jax.random.split(key, 8)
    f32 = jnp.float32
    pre_w = scale * jax.random.normal(ks[0], (hidden, half), f32)          # Conv1d(half, hidden, 1)
    pre_b = scale * jax.random.normal(ks[1], (hidden, 1), f32)
    # WN in_layers: Conv1d(hidden, 2*hidden, k, dilation=dilation_rate**i)
    in_w = scale * jax.random.normal(ks[2], (n_layers, kernel_size, 2 * hidden, hidden), f32)
    in_b = scale * jax.random.normal(ks[3], (n_layers, 2 * hidden, 1), f32)
    # WN res_skip_layers: Conv1d(hidden, 2*hidden or hidden, 1)
    rs_w = scale * jax.random.normal(ks[4], (n_layers, 2 * hidden, hidden), f32)
    rs_b = scale * jax.random.normal(ks[5], (n_layers, 2 * hidden, 1), f32)
    # last WN layer only has `hidden` output channels -> zero the unused half
    rs_w = rs_w.at[n_layers - 1, hidden:].set(0.0)
    rs_b = rs_b.at[n_layers - 1, hidden:].set(0.0)
    # post Conv1d(hidden, half, 1): PyTorch zero-inits this; small random values
    # here so the synthetic test exercises the full path.
    post_w = scale * jax.random.normal(ks[6], (half, hidden), f32)
    post_b = scale * jax.random.normal(ks[7], (half, 1), f32)
    return dict(pre_w=pre_w, pre_b=pre_b, in_w=in_w, in_b=in_b,
                rs_w=rs_w, rs_b=rs_b, post_w=post_w, post_b=post_b)


# ----------------------------------------------------------------------------
# Pure-JAX f32 reference (mirrors the PyTorch forward math) for validation
# ----------------------------------------------------------------------------
def _ref_flow(x, x_mask, p, hidden, n_layers, kernel_size, dilation_rate):
    half = x.shape[1] // 2
    x0, x1 = x[:, :half], x[:, half:]
    T = x.shape[-1]
    h = (jnp.einsum("oc,bct->bot", p["pre_w"], x0) + p["pre_b"][None]) * x_mask
    output = jnp.zeros_like(h)
    for i in range(n_layers):
        d = dilation_rate ** i
        pad = (kernel_size * d - d) // 2
        hp = jnp.pad(h, ((0, 0), (0, 0), (pad, pad)))
        x_in = p["in_b"][i][None]
        for j in range(kernel_size):
            x_in = x_in + jnp.einsum("oc,bct->bot", p["in_w"][i, j],
                                     hp[:, :, j * d: j * d + T])
        acts = jnp.tanh(x_in[:, :hidden]) * jax.nn.sigmoid(x_in[:, hidden:])
        rs = jnp.einsum("oc,bct->bot", p["rs_w"][i], acts) + p["rs_b"][i][None]
        if i < n_layers - 1:
            h = (h + rs[:, :hidden]) * x_mask
            output = output + rs[:, hidden:]
        else:
            output = output + rs[:, :hidden]
    h_out = output * x_mask
    m = (jnp.einsum("oc,bct->bot", p["post_w"], h_out) + p["post_b"][None]) * x_mask
    x1n = m + x1 * x_mask
    return jnp.concatenate([x0, x1n], axis=1)


def _ref_block(x, x_mask, flow_params, hidden, n_layers, kernel_size, dilation_rate):
    for p in flow_params:
        x = _ref_flow(x, x_mask, p, hidden, n_layers, kernel_size, dilation_rate)
        x = jnp.flip(x, axis=1)
    return x


# ----------------------------------------------------------------------------
if __name__ == "__main__":
    # Module hyper-parameters (small, consistent with the PyTorch __init__)
    B, C, T = 2, 4, 16
    hidden_channels = 32
    kernel_size = 5
    dilation_rate = 2
    n_layers = 2
    n_flows = 4
    half = C // 2

    roll_sign = detect_roll_sign()

    key = jax.random.PRNGKey(0)
    kx, kp = jax.random.split(key)
    x = jax.random.normal(kx, (B, C, T), jnp.float32)
    lengths = jnp.array([T, T - 5], jnp.int32)
    x_mask = (jnp.arange(T)[None, None, :] < lengths[:, None, None]).astype(jnp.float32)

    flow_keys = jax.random.split(kp, n_flows)
    flow_params = [init_flow_params(k, half, hidden_channels, kernel_size, n_layers)
                   for k in flow_keys]

    fwd = jax.jit(functools.partial(
        residual_coupling_block_forward,
        hidden=hidden_channels, n_layers=n_layers,
        kernel_size=kernel_size, dilation_rate=dilation_rate,
        roll_sign=roll_sign))

    y = jax.block_until_ready(fwd(x, x_mask, flow_params))

    y_ref = _ref_block(x, x_mask, flow_params, hidden_channels, n_layers,
                       kernel_size, dilation_rate)
    # Kernel uses bf16 matmul operands (f32 accumulation); reference is pure f32.
    np.testing.assert_allclose(np.asarray(y), np.asarray(y_ref),
                               rtol=5e-2, atol=5e-2)
    print("KERNEL_OK")
</pallas_src>

<mosaic_0001>
module attributes {stable_mosaic.version = 11 : i64} {
  func.func @_kernel(%arg0: memref<8x128xf32, #tpu.memory_space<vmem>>, %arg1: memref<8x128xf32, #tpu.memory_space<vmem>>) attributes {dimension_semantics = [], scalar_prefetch = 0 : i64, scratch_operands = 0 : i64, tpu.core_type = #tpu.core_type<tc>} {
    %c0 = arith.constant 0 : index
    %c0_0 = arith.constant 0 : index
    %0 = vector.load %arg0[%c0, %c0_0] : memref<8x128xf32, #tpu.memory_space<vmem>>, vector<8x128xf32>
    %c1_i32 = arith.constant 1 : i32
    %1 = tpu.dynamic_rotate %0 by %c1_i32 dim 1 : vector<8x128xf32>, i32 -> vector<8x128xf32>
    %c0_1 = arith.constant 0 : index
    %c0_2 = arith.constant 0 : index
    %2 = vector.load %arg1[%c0_1, %c0_2] : memref<8x128xf32, #tpu.memory_space<vmem>>, vector<8x128xf32>
    tpu.vector_store %arg1[%c0_1, %c0_2], %1 {strides = array<i32>} : memref<8x128xf32, #tpu.memory_space<vmem>>, vector<8x128xf32>,
    return
  }
}

</mosaic_0001>

<llo_original>
// kernel: tpu_custom_call.1
$region0: #{tpu_custom_call.1}
  #allocation0 [shape = 'u32[]', space=smem, size = 0x4, offset = 0x4, fixed_abs, tag = 'smem constant byte address 0x4 - core index']
  #allocation1 [shape = 'u32[144,128]{1,0:T(1,128)}', space=vmem, size = 0x12000, scoped, tag = 'internal scratch']
  %s0 = inlined_call_operand.hbm [shape: f32[8,128], index: 0, kind: input, shape index: {}]
  %s1 = inlined_call_operand.hbm [shape: f32[8,128], index: 1, kind: output, shape index: {}]
  %s2 = sld [smem:[#allocation0]]
  $region18: #{tpu_custom_call.1} parent=0
    _
  %s4 = ssub.s32 1, %s2
  %s5 = scalar_select 0, %s4, %s2
  $region1: #{tpu_custom_call.1} parent=0
    #allocation2 [shape = 'u8[4096]{0}', space=vmem, size = 0x1000, scoped, tag = 'input window, operand 0, single buffered']
    #allocation3 [shape = 's32[1]{0}', space=sflag, size = 0x4, scoped, tag = 'scoped memory for tpu_custom_call.1']
    #allocation4 [shape = 's32[1]{0}', space=sflag, size = 0x4, scoped, tag = 'scoped memory for tpu_custom_call.1']
    #allocation5 [shape = 'u8[4096]{0}', space=vmem, size = 0x1000, scoped, tag = 'output window, operand 0, single buffered']
    %6 = vsyncpa [#allocation3], 0
    %7 = vsyncpa [#allocation4], 0
    // Predicated region
    $region2: #{tpu_custom_call.1} parent=1 // pred_check
      _
    $region3: #{tpu_custom_call.1} parent=1 // pred_check_branch
      %9 = sbr.rel (0) target = $region5
    $region4: #{tpu_custom_call.1} parent=1 // pred_region
      %s11 = ssub.s32 128, 128
      %12 = vsyncadd [#allocation3], %s11
      %s14 = sshll.u32 [#allocation2], 4
      %s15 = int_to_ptr.vmem [resolvable:$true] %s14
      %17 = dma.hbm_to_vmem [thread:$0]  %s0, 128, %s15, [#allocation3]
    $region5: #{tpu_custom_call.1} parent=1 // pred_fallthru
      _
    // Predicated region
    $region6: #{tpu_custom_call.1} parent=1 // pred_check
      _
    $region7: #{tpu_custom_call.1} parent=1 // pred_check_branch
      %19 = sbr.rel (0) target = $region9
    $region8: #{tpu_custom_call.1} parent=1 // pred_region
      %20 = dma.done [#allocation3], 128
    $region9: #{tpu_custom_call.1} parent=1 // pred_fallthru
      _
    %v21 = vld [vmem:[#allocation2] sm:$0xff]
    %22 = vrot.lane.b32.xlu0 %v21, 1
    %v23 = vpop.permute.xlu0 %22
    %24 = vst [vmem:[#allocation5] sm:$0xff] %v23
    // Predicated region
    $region10: #{tpu_custom_call.1} parent=1 // pred_check
      _
    $region11: #{tpu_custom_call.1} parent=1 // pred_check_branch
      %26 = sbr.rel (0) target = $region13
    $region12: #{tpu_custom_call.1} parent=1 // pred_region
      %s28 = ssub.s32 128, 128
      %29 = vsyncadd [#allocation4], %s28
      %s31 = sshll.u32 [#allocation5], 4
      %s32 = int_to_ptr.vmem [resolvable:$true] %s31
      %34 = dma.vmem_to_hbm [thread:$0]  %s32, 128, %s1, [#allocation4]
    $region13: #{tpu_custom_call.1} parent=1 // pred_fallthru
      _
    // Predicated region
    $region14: #{tpu_custom_call.1} parent=1 // pred_check
      _
    $region15: #{tpu_custom_call.1} parent=1 // pred_check_branch
      %36 = sbr.rel (0) target = $region17
    $region16: #{tpu_custom_call.1} parent=1 // pred_region
      %37 = dma.done [#allocation4], 128
    $region17: #{tpu_custom_call.1} parent=1 // pred_fallthru
      _
    %38 = vsyncpa [#allocation3], 1
    %39 = vsyncpa [#allocation4], 1

</llo_original>
